<compile_context>
chip_gen: v7x
topology: tpu7x:2x2x1
jax: 0.10.0
libtpu: 0.0.40
codegen_flags: <defaults>
</compile_context>

<pallas_src>
import functools

import jax
import jax.numpy as jnp
from jax.experimental import pallas as pl
from jax.experimental.pallas import tpu as pltpu

NEG_SLOPE = 0.2      # LeakyReLU negative slope (module default)
MASK_SCALE = 1e30    # finite "minus infinity" for masked logits (NaN-safe)
_HIGHEST = jax.lax.Precision.HIGHEST


def gat_kernel(xq_ref, xk_ref, adj_ref, wcat_ref, b_ref, o_ref, *,
               heads, head_feats):
    """One (batch b, query-row-tile i) grid step of the GAT layer.

    xq_ref   : [1, TQ, M]          f32 query-row node features
    xk_ref   : [1, N,  M]          f32 all node features (keys / values side)
    adj_ref  : [1, TQ, N]          int8 transposed adjacency row tile
    wcat_ref : [M, 2*H*F + 2*H]    f32 fused weights [W | W@wi | W@wj | Wr]
    b_ref    : [1, H*F]            f32 bias
    o_ref    : [1, TQ, H*F]        f32 output (heads concatenated, lane-dense)
    """
    H, F = heads, head_feats
    HF = H * F

    wcat = wcat_ref[...]                                     # [M, 2HF+2H]
    xq = xq_ref[0]                                           # [TQ, M]
    xk = xk_ref[0]                                           # [N,  M]

    # Keys/values side (all N nodes): per-head features h and cj logits.
    # Re-computed per row tile; with tiny M this is <5% of the attention work.
    # TODO(synk): cast matmul operands to bf16 on v6e/v7x at large N (keep f32
    # accumulation via preferred_element_type); keep f32 on v5e.
    kv = jnp.dot(xk, wcat[:, :HF + 2 * H],
                 preferred_element_type=jnp.float32)         # [N, HF+2H]
    h_all = kv[:, :HF]                                       # [N, HF]
    cj_cols = kv[:, HF + H:HF + 2 * H]                       # [N, H]

    # Query side (TQ rows): ci logits and mapped residual.
    qc = jnp.dot(xq, wcat[:, HF:],
                 preferred_element_type=jnp.float32)         # [TQ, 2H+HF]
    ci_q = qc[:, :H]                                         # [TQ, H]
    r_q = qc[:, 2 * H:]                                      # [TQ, HF]

    # Additive mask, computed ONCE per tile (hoisted out of the head loop):
    # 0 where there is an edge, -1e30 otherwise.  int8 streaming keeps the
    # adjacency HBM/VMEM traffic 4x below an f32 mask.
    mask_add = (adj_ref[0].astype(jnp.float32) - 1.0) * MASK_SCALE  # [TQ, N]

    # Single small XLU transpose outside the per-head loop.
    cj_rows = cj_cols.T                                      # [H, N]

    # TODO(synk): for very large N (esp. v7x 64 MiB VMEM) also tile the key
    # axis with flash-style online max/sum, and move heads onto a grid axis /
    # lax.fori_loop so only one head's [TQ, N] temporaries are live at a time.
    y_heads = []
    for h in range(H):                   # H is small & static -> unrolled
        hf = h_all[:, h * F:(h + 1) * F]                     # [N, F]
        coe = ci_q[:, h:h + 1] + cj_rows[h:h + 1, :]         # [TQ, N]
        coe = jnp.maximum(coe, NEG_SLOPE * coe)              # LeakyReLU, 2 VPU ops
        logits = coe + mask_add                              # masked (additive)
        m = jnp.max(logits, axis=-1, keepdims=True)
        e = jnp.exp(logits - m)
        s = jnp.sum(e, axis=-1, keepdims=True)
        # TODO(synk): dropout on attention weights (module default p=0 ->
        # identity); for p>0 use pltpu.prng_seed / pltpu.prng_random_bits.
        y_un = jnp.dot(e, hf, preferred_element_type=jnp.float32)   # [TQ, F]
        y_heads.append(y_un / s)         # deferred, exact normalization

    # Lane-dense single store: heads concatenated along the last (lane) axis.
    y = jnp.concatenate(y_heads, axis=-1)                    # [TQ, HF]
    o_ref[0] = (y + r_q + b_ref[...]).astype(o_ref.dtype)


def fuse_gat_params(weight, weight_i, weight_j, weight_r, bias):
    """One-time parameter fusion (call once; hoisted out of the per-call path).

    ci = (x @ W_h) @ wi_h == x @ (W_h @ wi_h); same for cj; residual = x @ Wr.
    Returns (wcat [M, 2HF+2H], bias_row [1, HF]).
    """
    H, M, F = weight.shape
    HF = H * F
    w_all = jnp.transpose(weight, (1, 0, 2)).reshape(M, HF)             # [M, HF]
    w_ci = jnp.einsum('hmf,hfo->hmo', weight, weight_i,
                      precision=_HIGHEST)[..., 0].T                     # [M, H]
    w_cj = jnp.einsum('hmf,hfo->hmo', weight, weight_j,
                      precision=_HIGHEST)[..., 0].T                     # [M, H]
    wcat = jnp.concatenate([w_all, w_ci, w_cj, weight_r], axis=1)
    bias_row = bias.reshape(1, HF).astype(jnp.float32)
    return wcat.astype(jnp.float32), bias_row


def gat_forward(x, graph, wcat, bias_row, *, heads, head_feats, row_tile=None):
    """GAT forward.  Accepts a single graph (x [N,M], graph [N,N]) or a batch
    of graphs (x [B,N,M], graph [B,N,N]) to amortize launch/DMA overhead."""
    squeeze = (x.ndim == 2)
    if squeeze:
        x, graph = x[None], graph[None]
    B, N, M = x.shape
    H, F = heads, head_feats
    HF = H * F
    Wtot = wcat.shape[1]

    # Transposed adjacency, streamed as int8 row tiles.
    adj_t = (jnp.swapaxes(graph, -1, -2) > 0).astype(jnp.int8)          # [B,N,N]

    if row_tile is None:
        row_tile = N if N <= 256 else 256     # full-resident rows for small N
    grid = (B, pl.cdiv(N, row_tile))

    kernel = functools.partial(gat_kernel, heads=H, head_feats=F)

    out = pl.pallas_call(
        kernel,
        out_shape=jax.ShapeDtypeStruct((B, N, HF), jnp.float32),
        grid=grid,
        in_specs=[
            pl.BlockSpec((1, row_tile, M), lambda b, i: (b, i, 0)),  # query rows
            pl.BlockSpec((1, N, M), lambda b, i: (b, 0, 0)),         # all rows
            pl.BlockSpec((1, row_tile, N), lambda b, i: (b, i, 0)),  # adj tile
            pl.BlockSpec((M, Wtot), lambda b, i: (0, 0)),            # fused W
            pl.BlockSpec((1, HF), lambda b, i: (0, 0)),              # bias
        ],
        out_specs=pl.BlockSpec((1, row_tile, HF), lambda b, i: (b, i, 0)),
        compiler_params=pltpu.CompilerParams(
            # Both axes are independent -> v7x's two TensorCores split them.
            dimension_semantics=("parallel", "parallel"),
            # Raise v5e's 16 MiB default scoped limit; matches v6e/v7x default.
            # Can be raised further for large-N row tiles on v5e/v6e.
            vmem_limit_bytes=32 * 1024 * 1024,
        ),
    )(x, x, adj_t, wcat, bias_row)

    return out[0] if squeeze else out


def gat_reference(x, graph, weight, weight_i, weight_j, weight_r, bias):
    """Pure-JAX reference mirroring the PyTorch forward (p=0, concat=True,
    residual=True, bias=True, map_residual=True).  HIGHEST matmul precision so
    the comparison is not polluted by XLA's default bf16 MXU demotion."""
    N = x.shape[0]
    H, _, F = weight.shape
    h = jnp.einsum('nm,hmf->hnf', x, weight, precision=_HIGHEST)
    ci = jnp.einsum('hnf,hfo->hno', h, weight_i, precision=_HIGHEST)
    cj = jnp.einsum('hnf,hfo->hno', h, weight_j,
                    precision=_HIGHEST).transpose(0, 2, 1)
    s = ci + cj
    coe = jnp.where(s >= 0, s, NEG_SLOPE * s)
    mask = jnp.where(graph.T > 0, 0.0, -jnp.inf)
    att = jax.nn.softmax(coe + mask, axis=-1)
    y = jnp.einsum('hij,hjf->hif', att, h,
                   precision=_HIGHEST).transpose(1, 0, 2)               # [N,H,F]
    y = y + jnp.dot(x, weight_r, precision=_HIGHEST).reshape(N, H, F)
    return y.reshape(N, H * F) + bias


if __name__ == "__main__":
    # module config: in_features=8, out_features=16, heads=4 -> head_features=4
    B, N, M, H, F = 2, 16, 8, 4, 4
    OUT = H * F

    key = jax.random.PRNGKey(0)
    kx, kg, kw, ki, kj, kr = jax.random.split(key, 6)

    x = jax.random.normal(kx, (B, N, M), dtype=jnp.float32)

    # Random adjacency with guaranteed self-loops (avoids empty softmax rows;
    # the kernel is NaN-safe for isolated rows via the finite mask fill).
    graph = (jax.random.uniform(kg, (B, N, N)) > 0.6).astype(jnp.float32)
    graph = jnp.maximum(graph, jnp.eye(N, dtype=jnp.float32))

    def xavier(k, shape, fan_in, fan_out):
        std = (2.0 / (fan_in + fan_out)) ** 0.5
        return std * jax.random.normal(k, shape, dtype=jnp.float32)

    weight = xavier(kw, (H, M, F), M * F, H * F)
    weight_i = xavier(ki, (H, F, 1), F, H)
    weight_j = xavier(kj, (H, F, 1), F, H)
    weight_r = xavier(kr, (M, H * F), M, H * F)
    bias = jnp.zeros((OUT,), dtype=jnp.float32)

    # Parameter fusion done once, outside the per-call path.
    wcat, bias_row = fuse_gat_params(weight, weight_i, weight_j, weight_r, bias)

    y = gat_forward(x, graph, wcat, bias_row, heads=H, head_feats=F)
    y = jax.block_until_ready(y)

    y_ref = jax.vmap(
        gat_reference, in_axes=(0, 0, None, None, None, None, None)
    )(x, graph, weight, weight_i, weight_j, weight_r, bias)

    assert y.shape == (B, N, OUT)
    assert jnp.allclose(y, y_ref, atol=2e-3, rtol=2e-3), "mismatch vs reference"

    print("KERNEL_OK")
</pallas_src>

<mosaic_0001>
module attributes {stable_mosaic.version = 11 : i64} {
  func.func @gat_kernel(%arg0: i32, %arg1: i32, %arg2: memref<1x16x8xf32, #tpu.memory_space<vmem>>, %arg3: memref<1x16x8xf32, #tpu.memory_space<vmem>>, %arg4: memref<1x16x16xi8, #tpu.memory_space<vmem>>, %arg5: memref<8x40xf32, #tpu.memory_space<vmem>>, %arg6: memref<1x16xf32, #tpu.memory_space<vmem>>, %arg7: memref<1x16x16xf32, #tpu.memory_space<vmem>>) attributes {dimension_semantics = [#tpu.dimension_semantics<parallel>, #tpu.dimension_semantics<parallel>], iteration_bounds = array<i64: 2, 1>, scalar_prefetch = 0 : i64, scratch_operands = 0 : i64, tpu.core_type = #tpu.core_type<tc>, window_params = [{transform_indices = @transform_0, window_bounds = array<i64: 1, 16, 8>}, {transform_indices = @transform_1, window_bounds = array<i64: 1, 16, 8>}, {transform_indices = @transform_2, window_bounds = array<i64: 1, 16, 16>}, {pipeline_mode = #tpu.pipeline_mode<synchronous>, transform_indices = @transform_3, window_bounds = array<i64: 8, 40>}, {pipeline_mode = #tpu.pipeline_mode<synchronous>, transform_indices = @transform_4, window_bounds = array<i64: 1, 16>}, {transform_indices = @transform_5, window_bounds = array<i64: 1, 16, 16>}]} {
    %c0 = arith.constant 0 : index
    %c0_0 = arith.constant 0 : index
    %0 = vector.load %arg5[%c0, %c0_0] : memref<8x40xf32, #tpu.memory_space<vmem>>, vector<8x40xf32>
    %c0_1 = arith.constant 0 : index
    %c0_2 = arith.constant 0 : index
    %c0_3 = arith.constant 0 : index
    %1 = vector.load %arg2[%c0_1, %c0_2, %c0_3] : memref<1x16x8xf32, #tpu.memory_space<vmem>>, vector<1x16x8xf32>
    %2 = vector.shape_cast %1 : vector<1x16x8xf32> to vector<16x8xf32>
    %c0_4 = arith.constant 0 : index
    %c0_5 = arith.constant 0 : index
    %c0_6 = arith.constant 0 : index
    %3 = vector.load %arg3[%c0_4, %c0_5, %c0_6] : memref<1x16x8xf32, #tpu.memory_space<vmem>>, vector<1x16x8xf32>
    %4 = vector.shape_cast %3 : vector<1x16x8xf32> to vector<16x8xf32>
    %5 = vector.extract_strided_slice %0 {offsets = [0, 0], sizes = [8, 24], strides = [1, 1]} : vector<8x40xf32> to vector<8x24xf32>
    %cst = arith.constant dense<0.000000e+00> : vector<16x24xf32>
    %6 = tpu.matmul %4, %5, %cst {dimension_numbers = #tpu.dot_dimension_numbers<[1], [0], [0], [1], [0, 0, 1, 1], [], []>} : vector<16x8xf32>, vector<8x24xf32>, vector<16x24xf32> -> vector<16x24xf32>
    %7 = vector.extract_strided_slice %6 {offsets = [0, 0], sizes = [16, 16], strides = [1, 1]} : vector<16x24xf32> to vector<16x16xf32>
    %8 = vector.extract_strided_slice %6 {offsets = [0, 20], sizes = [16, 4], strides = [1, 1]} : vector<16x24xf32> to vector<16x4xf32>
    %9 = vector.extract_strided_slice %0 {offsets = [0, 16], sizes = [8, 24], strides = [1, 1]} : vector<8x40xf32> to vector<8x24xf32>
    %cst_7 = arith.constant dense<0.000000e+00> : vector<16x24xf32>
    %10 = tpu.matmul %2, %9, %cst_7 {dimension_numbers = #tpu.dot_dimension_numbers<[1], [0], [0], [1], [0, 0, 1, 1], [], []>} : vector<16x8xf32>, vector<8x24xf32>, vector<16x24xf32> -> vector<16x24xf32>
    %11 = vector.extract_strided_slice %10 {offsets = [0, 0], sizes = [16, 4], strides = [1, 1]} : vector<16x24xf32> to vector<16x4xf32>
    %12 = vector.extract_strided_slice %10 {offsets = [0, 8], sizes = [16, 16], strides = [1, 1]} : vector<16x24xf32> to vector<16x16xf32>
    %c0_8 = arith.constant 0 : index
    %c0_9 = arith.constant 0 : index
    %c0_10 = arith.constant 0 : index
    %13 = vector.load %arg4[%c0_8, %c0_9, %c0_10] : memref<1x16x16xi8, #tpu.memory_space<vmem>>, vector<1x16x16xi8>
    %14 = vector.shape_cast %13 : vector<1x16x16xi8> to vector<16x16xi8>
    %15 = arith.sitofp %14 : vector<16x16xi8> to vector<16x16xf32>
    %cst_11 = arith.constant 1.000000e+00 : f32
    %16 = vector.broadcast %cst_11 : f32 to vector<16x16xf32>
    %17 = arith.subf %15, %16 : vector<16x16xf32>
    %cst_12 = arith.constant 1.000000e+30 : f32
    %18 = vector.broadcast %cst_12 : f32 to vector<16x16xf32>
    %19 = arith.mulf %17, %18 : vector<16x16xf32>
    %20 = tpu.transpose %8, [1, 0] : vector<16x4xf32> -> vector<4x16xf32>
    %21 = vector.extract_strided_slice %7 {offsets = [0, 0], sizes = [16, 4], strides = [1, 1]} : vector<16x16xf32> to vector<16x4xf32>
    %22 = vector.extract_strided_slice %11 {offsets = [0, 0], sizes = [16, 1], strides = [1, 1]} : vector<16x4xf32> to vector<16x1xf32>
    %23 = vector.extract_strided_slice %20 {offsets = [0, 0], sizes = [1, 16], strides = [1, 1]} : vector<4x16xf32> to vector<1x16xf32>
    %24 = vector.broadcast %22 : vector<16x1xf32> to vector<16x16xf32>
    %25 = vector.broadcast %23 : vector<1x16xf32> to vector<16x16xf32>
    %26 = arith.addf %24, %25 : vector<16x16xf32>
    %cst_13 = arith.constant 2.000000e-01 : f32
    %27 = vector.broadcast %cst_13 : f32 to vector<16x16xf32>
    %28 = arith.mulf %27, %26 : vector<16x16xf32>
    %29 = arith.maximumf %26, %28 : vector<16x16xf32>
    %30 = arith.addf %29, %19 : vector<16x16xf32>
    %cst_14 = arith.constant dense<0xFF800000> : vector<16xf32>
    %31 = vector.multi_reduction <maximumf>, %30, %cst_14 [1] : vector<16x16xf32> to vector<16xf32>
    %32 = vector.shape_cast %31 : vector<16xf32> to vector<16x1xf32>
    %33 = vector.broadcast %32 : vector<16x1xf32> to vector<16x16xf32>
    %34 = arith.subf %30, %33 : vector<16x16xf32>
    %35 = math.exp %34 : vector<16x16xf32>
    %cst_15 = arith.constant dense<0.000000e+00> : vector<16xf32>
    %36 = vector.multi_reduction <add>, %35, %cst_15 [1] : vector<16x16xf32> to vector<16xf32>
    %37 = vector.shape_cast %36 : vector<16xf32> to vector<16x1xf32>
    %cst_16 = arith.constant dense<0.000000e+00> : vector<16x4xf32>
    %38 = tpu.matmul %35, %21, %cst_16 {dimension_numbers = #tpu.dot_dimension_numbers<[1], [0], [0], [1], [0, 0, 1, 1], [], []>} : vector<16x16xf32>, vector<16x4xf32>, vector<16x4xf32> -> vector<16x4xf32>
    %39 = vector.broadcast %37 : vector<16x1xf32> to vector<16x4xf32>
    %40 = arith.divf %38, %39 : vector<16x4xf32>
    %41 = vector.extract_strided_slice %7 {offsets = [0, 4], sizes = [16, 4], strides = [1, 1]} : vector<16x16xf32> to vector<16x4xf32>
    %42 = vector.extract_strided_slice %11 {offsets = [0, 1], sizes = [16, 1], strides = [1, 1]} : vector<16x4xf32> to vector<16x1xf32>
    %43 = vector.extract_strided_slice %20 {offsets = [1, 0], sizes = [1, 16], strides = [1, 1]} : vector<4x16xf32> to vector<1x16xf32>
    %44 = vector.broadcast %42 : vector<16x1xf32> to vector<16x16xf32>
    %45 = vector.broadcast %43 : vector<1x16xf32> to vector<16x16xf32>
    %46 = arith.addf %44, %45 : vector<16x16xf32>
    %cst_17 = arith.constant 2.000000e-01 : f32
    %47 = vector.broadcast %cst_17 : f32 to vector<16x16xf32>
    %48 = arith.mulf %47, %46 : vector<16x16xf32>
    %49 = arith.maximumf %46, %48 : vector<16x16xf32>
    %50 = arith.addf %49, %19 : vector<16x16xf32>
    %cst_18 = arith.constant dense<0xFF800000> : vector<16xf32>
    %51 = vector.multi_reduction <maximumf>, %50, %cst_18 [1] : vector<16x16xf32> to vector<16xf32>
    %52 = vector.shape_cast %51 : vector<16xf32> to vector<16x1xf32>
    %53 = vector.broadcast %52 : vector<16x1xf32> to vector<16x16xf32>
    %54 = arith.subf %50, %53 : vector<16x16xf32>
    %55 = math.exp %54 : vector<16x16xf32>
    %cst_19 = arith.constant dense<0.000000e+00> : vector<16xf32>
    %56 = vector.multi_reduction <add>, %55, %cst_19 [1] : vector<16x16xf32> to vector<16xf32>
    %57 = vector.shape_cast %56 : vector<16xf32> to vector<16x1xf32>
    %cst_20 = arith.constant dense<0.000000e+00> : vector<16x4xf32>
    %58 = tpu.matmul %55, %41, %cst_20 {dimension_numbers = #tpu.dot_dimension_numbers<[1], [0], [0], [1], [0, 0, 1, 1], [], []>} : vector<16x16xf32>, vector<16x4xf32>, vector<16x4xf32> -> vector<16x4xf32>
    %59 = vector.broadcast %57 : vector<16x1xf32> to vector<16x4xf32>
    %60 = arith.divf %58, %59 : vector<16x4xf32>
    %61 = vector.extract_strided_slice %7 {offsets = [0, 8], sizes = [16, 4], strides = [1, 1]} : vector<16x16xf32> to vector<16x4xf32>
    %62 = vector.extract_strided_slice %11 {offsets = [0, 2], sizes = [16, 1], strides = [1, 1]} : vector<16x4xf32> to vector<16x1xf32>
    %63 = vector.extract_strided_slice %20 {offsets = [2, 0], sizes = [1, 16], strides = [1, 1]} : vector<4x16xf32> to vector<1x16xf32>
    %64 = vector.broadcast %62 : vector<16x1xf32> to vector<16x16xf32>
    %65 = vector.broadcast %63 : vector<1x16xf32> to vector<16x16xf32>
    %66 = arith.addf %64, %65 : vector<16x16xf32>
    %cst_21 = arith.constant 2.000000e-01 : f32
    %67 = vector.broadcast %cst_21 : f32 to vector<16x16xf32>
    %68 = arith.mulf %67, %66 : vector<16x16xf32>
    %69 = arith.maximumf %66, %68 : vector<16x16xf32>
    %70 = arith.addf %69, %19 : vector<16x16xf32>
    %cst_22 = arith.constant dense<0xFF800000> : vector<16xf32>
    %71 = vector.multi_reduction <maximumf>, %70, %cst_22 [1] : vector<16x16xf32> to vector<16xf32>
    %72 = vector.shape_cast %71 : vector<16xf32> to vector<16x1xf32>
    %73 = vector.broadcast %72 : vector<16x1xf32> to vector<16x16xf32>
    %74 = arith.subf %70, %73 : vector<16x16xf32>
    %75 = math.exp %74 : vector<16x16xf32>
    %cst_23 = arith.constant dense<0.000000e+00> : vector<16xf32>
    %76 = vector.multi_reduction <add>, %75, %cst_23 [1] : vector<16x16xf32> to vector<16xf32>
    %77 = vector.shape_cast %76 : vector<16xf32> to vector<16x1xf32>
    %cst_24 = arith.constant dense<0.000000e+00> : vector<16x4xf32>
    %78 = tpu.matmul %75, %61, %cst_24 {dimension_numbers = #tpu.dot_dimension_numbers<[1], [0], [0], [1], [0, 0, 1, 1], [], []>} : vector<16x16xf32>, vector<16x4xf32>, vector<16x4xf32> -> vector<16x4xf32>
    %79 = vector.broadcast %77 : vector<16x1xf32> to vector<16x4xf32>
    %80 = arith.divf %78, %79 : vector<16x4xf32>
    %81 = vector.extract_strided_slice %7 {offsets = [0, 12], sizes = [16, 4], strides = [1, 1]} : vector<16x16xf32> to vector<16x4xf32>
    %82 = vector.extract_strided_slice %11 {offsets = [0, 3], sizes = [16, 1], strides = [1, 1]} : vector<16x4xf32> to vector<16x1xf32>
    %83 = vector.extract_strided_slice %20 {offsets = [3, 0], sizes = [1, 16], strides = [1, 1]} : vector<4x16xf32> to vector<1x16xf32>
    %84 = vector.broadcast %82 : vector<16x1xf32> to vector<16x16xf32>
    %85 = vector.broadcast %83 : vector<1x16xf32> to vector<16x16xf32>
    %86 = arith.addf %84, %85 : vector<16x16xf32>
    %cst_25 = arith.constant 2.000000e-01 : f32
    %87 = vector.broadcast %cst_25 : f32 to vector<16x16xf32>
    %88 = arith.mulf %87, %86 : vector<16x16xf32>
    %89 = arith.maximumf %86, %88 : vector<16x16xf32>
    %90 = arith.addf %89, %19 : vector<16x16xf32>
    %cst_26 = arith.constant dense<0xFF800000> : vector<16xf32>
    %91 = vector.multi_reduction <maximumf>, %90, %cst_26 [1] : vector<16x16xf32> to vector<16xf32>
    %92 = vector.shape_cast %91 : vector<16xf32> to vector<16x1xf32>
    %93 = vector.broadcast %92 : vector<16x1xf32> to vector<16x16xf32>
    %94 = arith.subf %90, %93 : vector<16x16xf32>
    %95 = math.exp %94 : vector<16x16xf32>
    %cst_27 = arith.constant dense<0.000000e+00> : vector<16xf32>
    %96 = vector.multi_reduction <add>, %95, %cst_27 [1] : vector<16x16xf32> to vector<16xf32>
    %97 = vector.shape_cast %96 : vector<16xf32> to vector<16x1xf32>
    %cst_28 = arith.constant dense<0.000000e+00> : vector<16x4xf32>
    %98 = tpu.matmul %95, %81, %cst_28 {dimension_numbers = #tpu.dot_dimension_numbers<[1], [0], [0], [1], [0, 0, 1, 1], [], []>} : vector<16x16xf32>, vector<16x4xf32>, vector<16x4xf32> -> vector<16x4xf32>
    %99 = vector.broadcast %97 : vector<16x1xf32> to vector<16x4xf32>
    %100 = arith.divf %98, %99 : vector<16x4xf32>
    %101 = tpu.concatenate %40, %60, %80, %100 in 1 : vector<16x4xf32>, vector<16x4xf32>, vector<16x4xf32>, vector<16x4xf32> -> vector<16x16xf32>
    %102 = arith.addf %101, %12 : vector<16x16xf32>
    %c0_29 = arith.constant 0 : index
    %c0_30 = arith.constant 0 : index
    %103 = vector.load %arg6[%c0_29, %c0_30] : memref<1x16xf32, #tpu.memory_space<vmem>>, vector<1x16xf32>
    %104 = vector.broadcast %103 : vector<1x16xf32> to vector<16x16xf32>
    %105 = arith.addf %102, %104 : vector<16x16xf32>
    %c0_31 = arith.constant 0 : index
    %c0_32 = arith.constant 0 : index
    %c0_33 = arith.constant 0 : index
    %106 = vector.load %arg7[%c0_31, %c0_32, %c0_33] : memref<1x16x16xf32, #tpu.memory_space<vmem>>, vector<1x16x16xf32>
    %107 = vector.shape_cast %106 : vector<1x16x16xf32> to vector<16x16xf32>
    %108 = vector.shape_cast %105 : vector<16x16xf32> to vector<1x16x16xf32>
    tpu.vector_store %arg7[%c0_31, %c0_32, %c0_33], %108 {strides = array<i32>} : memref<1x16x16xf32, #tpu.memory_space<vmem>>, vector<1x16x16xf32>,
    return
  }
  func.func @transform_0(%arg0: i32, %arg1: i32) -> (i32, i32, i32) {
    %c0_i32 = arith.constant 0 : i32
    %c0_i32_0 = arith.constant 0 : i32
    return %arg0, %arg1, %c0_i32 : i32, i32, i32
  }
  func.func @transform_1(%arg0: i32, %arg1: i32) -> (i32, i32, i32) {
    %c0_i32 = arith.constant 0 : i32
    %c0_i32_0 = arith.constant 0 : i32
    %c0_i32_1 = arith.constant 0 : i32
    return %arg0, %c0_i32, %c0_i32_0 : i32, i32, i32
  }
  func.func @transform_2(%arg0: i32, %arg1: i32) -> (i32, i32, i32) {
    %c0_i32 = arith.constant 0 : i32
    %c0_i32_0 = arith.constant 0 : i32
    return %arg0, %arg1, %c0_i32 : i32, i32, i32
  }
  func.func @transform_3(%arg0: i32, %arg1: i32) -> (i32, i32) {
    %c0_i32 = arith.constant 0 : i32
    %c0_i32_0 = arith.constant 0 : i32
    %c0_i32_1 = arith.constant 0 : i32
    return %c0_i32, %c0_i32_0 : i32, i32
  }
  func.func @transform_4(%arg0: i32, %arg1: i32) -> (i32, i32) {
    %c0_i32 = arith.constant 0 : i32
    %c0_i32_0 = arith.constant 0 : i32
    %c0_i32_1 = arith.constant 0 : i32
    return %c0_i32, %c0_i32_0 : i32, i32
  }
  func.func @transform_5(%arg0: i32, %arg1: i32) -> (i32, i32, i32) {
    %c0_i32 = arith.constant 0 : i32
    %c0_i32_0 = arith.constant 0 : i32
    return %arg0, %arg1, %c0_i32 : i32, i32, i32
  }
}

</mosaic_0001>

<llo_original>
// kernel: tpu_custom_call.1
$region0: #{tpu_custom_call.1}
  #allocation0 [shape = 'u32[]', space=smem, size = 0x4, offset = 0x4, fixed_abs, tag = 'smem constant byte address 0x4 - core index']
  #allocation1 [shape = 'u32[144,128]{1,0:T(1,128)}', space=vmem, size = 0x12000, scoped, tag = 'internal scratch']
  %s0 = inlined_call_operand.vmem [shape: f32[2,16,8], index: 0, kind: input, shape index: {}]
  %s1 = inlined_call_operand.vmem [shape: f32[2,16,8], index: 1, kind: input, shape index: {}]
  %s2 = inlined_call_operand.vmem [shape: s8[2,16,16], index: 2, kind: input, shape index: {}]
  %s3 = inlined_call_operand.vmem [shape: f32[8,40], index: 3, kind: input, shape index: {}]
  %s4 = inlined_call_operand.vmem [shape: f32[1,16], index: 4, kind: input, shape index: {}]
  %s5 = inlined_call_operand.hbm [shape: f32[2,16,16], index: 5, kind: output, shape index: {}]
  %s6 = sld [smem:[#allocation0]]
  $region53: #{tpu_custom_call.1} parent=0
    _
  %s8 = ssub.s32 1, %s6
  %s9 = scalar_select 0, %s8, %s6
  $region1: #{tpu_custom_call.1} parent=0
    #allocation2 [shape = 'u8[16384]{0}', space=vmem, size = 0x4000, scoped, tag = 'output window, operand 0']
    #allocation3 [shape = 's32[2]{0}', space=sflag, size = 0x8, scoped, tag = 'scoped memory for tpu_custom_call.1']
    %10 = vsyncpa [#allocation3], 0
    %s11 = scalar_lea.sflag [#allocation3], 1
    %12 = vsyncpa %s11, 0
    loop: start=0, step=1, limit=4
    $region2: #{tpu_custom_call.1} parent=1 // loop_pre_header
      _
    $region3: #{tpu_custom_call.1} parent=1 // loop_header
      %s14 = sphi 0, %s18
      %p15 = scmp.ge.s32.totalorder %s14, 4
      %s21 = sphi 0, %s33
      %s22 = sphi 0, %s29
      %s23 = sphi 0, %s21
      %s24 = sphi 0, %s22
      %s25 = sphi 0, %s23
      %s26 = sphi 0, %s24
      %s38 = sphi 0, %s40
      %s41 = sphi 0, %s38
      %s42 = sphi 0, %s41
      %s58 = sphi 0, %s42
      %s64 = sphi 0, %s66
      %s67 = sphi 0, %s64
      %s68 = sphi 0, %s67
      %s84 = sphi 0, %s68
      %s92 = sphi 0, %s94
      %s95 = sphi 0, %s92
      %s96 = sphi 0, %s95
      %s112 = sphi 0, %s96
      %s116 = sphi 0, %s116
      %s118 = sphi 0, %s116
      %s119 = sphi 0, %s118
      %s133 = sphi 0, %s119
      %s137 = sphi 0, %s137
      %s139 = sphi 0, %s137
      %s140 = sphi 0, %s139
      %s154 = sphi 0, %s140
      %s162 = sphi 0, %s164
      %s165 = sphi 0, %s162
      %s166 = sphi 0, %s165
      %s182 = sphi 0, %s166
    $region4: #{tpu_custom_call.1} parent=1 // loop_header_branch
      %17 = sbr.rel (%p15) target = $region8
    $region5: #{tpu_custom_call.1} parent=1 // loop_body
      %s19 = ssub.s32 %s14, 1
      %s20 = ssub.s32 %s14, 2
      %s27 = sadd.s32 1, %s22
      %p28 = scmp.ge.s32.totalorder %s27, 1
      %s29 = scalar_select %p28, 0, %s27
      %s30 = sadd.s32 1, %s21
      %s31 = scalar_select %p28, %s30, %s21
      %p32 = scmp.ge.s32.totalorder %s31, 2
      %s33 = scalar_select %p32, 0, %s31
      %s34 = ssub.s32 %s21, %s33
      %s35 = ssub.s32 %s22, %s29
      %s36 = sor.u32 %s34, %s35
      %p37 = scmp.eq.s32.totalorder %s36, 0
      %s39 = sadd.s32 %s38, 1
      %s40 = scalar_select %p37, %s38, %s39
      %p43 = pneg %p37
      %p44 = scmp.eq.s32.totalorder %s14, 1
      %p45 = por %p43, %p44
      %p46 = scmp.ne.s32.totalorder %s38, %s41
      %p47 = scmp.eq.s32.totalorder %s14, 0
      %p48 = por %p46, %p47
      %p49 = scmp.ne.s32.totalorder %s38, %s41
      %p50 = scmp.eq.s32.totalorder %s19, 1
      %p51 = por %p49, %p50
      %p52 = scmp.ne.s32.totalorder %s41, %s42
      %p53 = scmp.eq.s32.totalorder %s19, 0
      %p54 = por %p52, %p53
      %p55 = scmp.ne.s32.totalorder %s41, %s42
      %p56 = scmp.eq.s32.totalorder %s20, 1
      %p57 = por %p55, %p56
      %p59 = scmp.ne.s32.totalorder %s42, %s58
      %p60 = scmp.eq.s32.totalorder %s20, 0
      %p61 = por %p59, %p60
      %s62 = ssub.s32 %s21, %s33
      %p63 = scmp.eq.s32.totalorder %s62, 0
      %s65 = sadd.s32 %s64, 1
      %s66 = scalar_select %p63, %s64, %s65
      %p69 = pneg %p63
      %p70 = scmp.eq.s32.totalorder %s14, 1
      %p71 = por %p69, %p70
      %p72 = scmp.ne.s32.totalorder %s64, %s67
      %p73 = scmp.eq.s32.totalorder %s14, 0
      %p74 = por %p72, %p73
      %p75 = scmp.ne.s32.totalorder %s64, %s67
      %p76 = scmp.eq.s32.totalorder %s19, 1
      %p77 = por %p75, %p76
      %p78 = scmp.ne.s32.totalorder %s67, %s68
      %p79 = scmp.eq.s32.totalorder %s19, 0
      %p80 = por %p78, %p79
      %p81 = scmp.ne.s32.totalorder %s67, %s68
      %p82 = scmp.eq.s32.totalorder %s20, 1
      %p83 = por %p81, %p82
      %p85 = scmp.ne.s32.totalorder %s68, %s84
      %p86 = scmp.eq.s32.totalorder %s20, 0
      %p87 = por %p85, %p86
      %s88 = ssub.s32 %s21, %s33
      %s89 = ssub.s32 %s22, %s29
      %s90 = sor.u32 %s88, %s89
      %p91 = scmp.eq.s32.totalorder %s90, 0
      %s93 = sadd.s32 %s92, 1
      %s94 = scalar_select %p91, %s92, %s93
      %p97 = pneg %p91
      %p98 = scmp.eq.s32.totalorder %s14, 1
      %p99 = por %p97, %p98
      %p100 = scmp.ne.s32.totalorder %s92, %s95
      %p101 = scmp.eq.s32.totalorder %s14, 0
      %p102 = por %p100, %p101
      %p103 = scmp.ne.s32.totalorder %s92, %s95
      %p104 = scmp.eq.s32.totalorder %s19, 1
      %p105 = por %p103, %p104
      %p106 = scmp.ne.s32.totalorder %s95, %s96
      %p107 = scmp.eq.s32.totalorder %s19, 0
      %p108 = por %p106, %p107
      %p109 = scmp.ne.s32.totalorder %s95, %s96
      %p110 = scmp.eq.s32.totalorder %s20, 1
      %p111 = por %p109, %p110
      %p113 = scmp.ne.s32.totalorder %s96, %s112
      %p114 = scmp.eq.s32.totalorder %s20, 0
      %p115 = por %p113, %p114
      %s117 = sadd.s32 %s116, 1
      %p120 = scmp.eq.s32.totalorder %s14, 1
      %p121 = scmp.ne.s32.totalorder %s116, %s118
      %p122 = scmp.eq.s32.totalorder %s14, 0
      %p123 = por %p121, %p122
      %p124 = scmp.ne.s32.totalorder %s116, %s118
      %p125 = scmp.eq.s32.totalorder %s19, 1
      %p126 = por %p124, %p125
      %p127 = scmp.ne.s32.totalorder %s118, %s119
      %p128 = scmp.eq.s32.totalorder %s19, 0
      %p129 = por %p127, %p128
      %p130 = scmp.ne.s32.totalorder %s118, %s119
      %p131 = scmp.eq.s32.totalorder %s20, 1
      %p132 = por %p130, %p131
      %p134 = scmp.ne.s32.totalorder %s119, %s133
      %p135 = scmp.eq.s32.totalorder %s20, 0
      %p136 = por %p134, %p135
      %s138 = sadd.s32 %s137, 1
      %p141 = scmp.eq.s32.totalorder %s14, 1
      %p142 = scmp.ne.s32.totalorder %s137, %s139
      %p143 = scmp.eq.s32.totalorder %s14, 0
      %p144 = por %p142, %p143
      %p145 = scmp.ne.s32.totalorder %s137, %s139
      %p146 = scmp.eq.s32.totalorder %s19, 1
      %p147 = por %p145, %p146
      %p148 = scmp.ne.s32.totalorder %s139, %s140
      %p149 = scmp.eq.s32.totalorder %s19, 0
      %p150 = por %p148, %p149
      %p151 = scmp.ne.s32.totalorder %s139, %s140
      %p152 = scmp.eq.s32.totalorder %s20, 1
      %p153 = por %p151, %p152
      %p155 = scmp.ne.s32.totalorder %s140, %s154
      %p156 = scmp.eq.s32.totalorder %s20, 0
      %p157 = por %p155, %p156
      %s158 = ssub.s32 %s21, %s33
      %s159 = ssub.s32 %s22, %s29
      %s160 = sor.u32 %s158, %s159
      %p161 = scmp.eq.s32.totalorder %s160, 0
      %s163 = sadd.s32 %s162, 1
      %s164 = scalar_select %p161, %s162, %s163
      %p167 = pneg %p161
      %p168 = scmp.eq.s32.totalorder %s14, 1
      %p169 = por %p167, %p168
      %p170 = scmp.ne.s32.totalorder %s162, %s165
      %p171 = scmp.eq.s32.totalorder %s14, 0
      %p172 = por %p170, %p171
      %p173 = scmp.ne.s32.totalorder %s162, %s165
      %p174 = scmp.eq.s32.totalorder %s19, 1
      %p175 = por %p173, %p174
      %p176 = scmp.ne.s32.totalorder %s165, %s166
      %p177 = scmp.eq.s32.totalorder %s19, 0
      %p178 = por %p176, %p177
      %p179 = scmp.ne.s32.totalorder %s165, %s166
      %p180 = scmp.eq.s32.totalorder %s20, 1
      %p181 = por %p179, %p180
      %p183 = scmp.ne.s32.totalorder %s166, %s182
      %p184 = scmp.eq.s32.totalorder %s20, 0
      %p185 = por %p183, %p184
      %p186 = scmp.le.s32.totalorder 1, %s14
      %p187 = scmp.lt.s32.totalorder %s14, 3
      %p188 = pnand %p186, %p187
      %p189 = pneg %p188
      // Predicated region
      $region9: #{tpu_custom_call.1} parent=5 // pred_check
        _
      $region10: #{tpu_custom_call.1} parent=5 // pred_check_branch
        %191 = sbr.rel (%p188) target = $region12
      $region11: #{tpu_custom_call.1} parent=5 // pred_region
        %s192 = ssub.s32 %s14, 1
        // Predicated region
        $region13: #{tpu_custom_call.1} parent=11 // pred_check
          %p193 = pneg %p129
        $region14: #{tpu_custom_call.1} parent=11 // pred_check_branch
          %195 = sbr.rel (%p193) target = $region16
        $region15: #{tpu_custom_call.1} parent=11 // pred_region
          _
        $region16: #{tpu_custom_call.1} parent=11 // pred_fallthru
          _
        // Predicated region
        $region17: #{tpu_custom_call.1} parent=11 // pred_check
          %p196 = pneg %p150
        $region18: #{tpu_custom_call.1} parent=11 // pred_check_branch
          %198 = sbr.rel (%p196) target = $region20
        $region19: #{tpu_custom_call.1} parent=11 // pred_region
          _
        $region20: #{tpu_custom_call.1} parent=11 // pred_fallthru
          _
      $region12: #{tpu_custom_call.1} parent=5 // pred_fallthru
        _
      %p199 = scmp.lt.s32.totalorder %s14, 2
      // Predicated region
      $region21: #{tpu_custom_call.1} parent=5 // pred_check
        %p200 = pneg %p199
      $region22: #{tpu_custom_call.1} parent=5 // pred_check_branch
        %202 = sbr.rel (%p200) target = $region24
      $region23: #{tpu_custom_call.1} parent=5 // pred_region
        // Predicated region
        $region25: #{tpu_custom_call.1} parent=23 // pred_check
          %p203 = pneg %p48
        $region26: #{tpu_custom_call.1} parent=23 // pred_check_branch
          %205 = sbr.rel (%p203) target = $region28
        $region27: #{tpu_custom_call.1} parent=23 // pred_region
          %s206 = smul.u32 2, %s22
          %p207 = scmp.lt.s32.totalorder %s21, 1
          %s208 = scalar_select %p207, %s21, 1
          %p209 = scmp.lt.s32.totalorder %s206, 1
          %s210 = scalar_select %p209, %s206, 1
          %s211 = smul.addr %s208, 2
          %s212 = sadd.s32 %s210, %s211
          %s213 = smul.addr %s212, 8
          %s214 = scalar_lea.vmem %s0, %s213
          %s215 = smul.u32 2, %s22
        $region28: #{tpu_custom_call.1} parent=23 // pred_fallthru
          _
        // Predicated region
        $region29: #{tpu_custom_call.1} parent=23 // pred_check
          %p216 = pneg %p74
        $region30: #{tpu_custom_call.1} parent=23 // pred_check_branch
          %218 = sbr.rel (%p216) target = $region32
        $region31: #{tpu_custom_call.1} parent=23 // pred_region
          %p219 = scmp.lt.s32.totalorder %s21, 1
          %s220 = scalar_select %p219, %s21, 1
          %s221 = smul.addr %s220, 2
          %s222 = smul.addr %s221, 8
          %s223 = scalar_lea.vmem %s1, %s222
        $region32: #{tpu_custom_call.1} parent=23 // pred_fallthru
          _
        // Predicated region
        $region33: #{tpu_custom_call.1} parent=23 // pred_check
          %p224 = pneg %p102
        $region34: #{tpu_custom_call.1} parent=23 // pred_check_branch
          %226 = sbr.rel (%p224) target = $region36
        $region35: #{tpu_custom_call.1} parent=23 // pred_region
          %s227 = smul.u32 2, %s22
          %p228 = scmp.lt.s32.totalorder %s21, 1
          %s229 = scalar_select %p228, %s21, 1
          %p230 = scmp.lt.s32.totalorder %s227, 1
          %s231 = scalar_select %p230, %s227, 1
          %s232 = smul.addr %s229, 2
          %s233 = sadd.s32 %s231, %s232
          %s234 = smul.addr %s233, 2
          %s235 = scalar_lea.vmem %s2, %s234
          %s236 = smul.u32 2, %s22
        $region36: #{tpu_custom_call.1} parent=23 // pred_fallthru
          _
      $region24: #{tpu_custom_call.1} parent=5 // pred_fallthru
        _
      %p237 = scmp.le.s32.totalorder 1, %s14
      %p238 = scmp.lt.s32.totalorder %s14, 3
      %p239 = pnand %p237, %p238
      %p240 = pneg %p239
      // Predicated region
      $region37: #{tpu_custom_call.1} parent=5 // pred_check
        _
      $region38: #{tpu_custom_call.1} parent=5 // pred_check_branch
        %242 = sbr.rel (%p239) target = $region40
      $region39: #{tpu_custom_call.1} parent=5 // pred_region
        %s243 = ssub.s32 %s14, 1
        %s244 = smul.u32 2, %s24
        %p245 = scmp.lt.s32.totalorder %s23, 1
        %s246 = scalar_select %p245, %s23, 1
        %p247 = scmp.lt.s32.totalorder %s244, 1
        %s248 = scalar_select %p247, %s244, 1
        %s249 = smul.addr %s246, 2
        %s250 = sadd.s32 %s248, %s249
        %s251 = smul.addr %s250, 8
        %s252 = scalar_lea.vmem %s0, %s251
        %p253 = pneg %p54
        %p254 = pneg %p51
        %p255 = scmp.lt.s32.totalorder %s23, 1
        %s256 = scalar_select %p255, %s23, 1
        %s257 = smul.addr %s256, 2
        %s258 = smul.addr %s257, 8
        %s259 = scalar_lea.vmem %s1, %s258
        %p260 = pneg %p80
        %p261 = pneg %p77
        %s262 = smul.u32 2, %s24
        %p263 = scmp.lt.s32.totalorder %s23, 1
        %s264 = scalar_select %p263, %s23, 1
        %p265 = scmp.lt.s32.totalorder %s262, 1
        %s266 = scalar_select %p265, %s262, 1
        %s267 = smul.addr %s264, 2
        %s268 = sadd.s32 %s266, %s267
        %s269 = smul.addr %s268, 2
        %s270 = scalar_lea.vmem %s2, %s269
        %p271 = pneg %p108
        %p272 = pneg %p105
        %p273 = pneg %p129
        %p274 = pneg %p126
        %p275 = pneg %p150
        %p276 = pneg %p147
        %p277 = pneg %p178
        %p278 = pneg %p175
        %s279 = sand.u32 %s165, 1
        %s280 = scalar_lea.sflag [#allocation3], %s279
        %s281 = sand.u32 %s165, 1
        %s282 = smul.addr %s281, 16
        %s283 = scalar_lea.vmem [#allocation2], %s282
        %s284 = smul.u32 2, %s24
        %p285 = scmp.lt.s32.totalorder %s23, 1
        %s286 = scalar_select %p285, %s23, 1
        %p287 = scmp.lt.s32.totalorder %s284, 1
        %s288 = scalar_select %p287, %s284, 1
        %s289 = smul.addr %s286, 2
        %s290 = sadd.s32 %s288, %s289
        %s291 = smul.addr %s290, 8
        %s292 = scalar_lea.vmem %s0, %s291
        %s293 = smul.u32 2, %s24
        %p294 = scmp.lt.s32.totalorder %s23, 1
        %s295 = scalar_select %p294, %s23, 1
        %s296 = smul.addr %s295, 2
        %s297 = smul.addr %s296, 8
        %s298 = scalar_lea.vmem %s1, %s297
        %s299 = smul.u32 2, %s24
        %p300 = scmp.lt.s32.totalorder %s23, 1
        %s301 = scalar_select %p300, %s23, 1
        %p302 = scmp.lt.s32.totalorder %s299, 1
        %s303 = scalar_select %p302, %s299, 1
        %s304 = smul.addr %s301, 2
        %s305 = sadd.s32 %s303, %s304
        %s306 = smul.addr %s305, 2
        %s307 = scalar_lea.vmem %s2, %s306
        %s308 = smul.u32 2, %s24
        %s309 = smul.u32 2, %s24
        %v310 = vld [vmem:[%s3] sm:$0xff]
        %v311 = vld [vmem:[%s292] sm:$0xff]
        %v312 = vld [vmem:[%s292 + $0x8] sm:$0xff]
        %v313 = vld [vmem:[%s298] sm:$0xff]
        %v314 = vld [vmem:[%s298 + $0x8] sm:$0xff]
        %vm315 = vcmask 64512
        %v317 = vsel %vm315, %v313, 0
        %v320 = vsel %vm315, %v314, 0
        %322 = vmatprep.subr.mxu0 0.0
        %323 = vmatpush1.msra.mxu0 %v310
        %324 = vmatprep.subr.mxu0 0.0
        %325 = vmatpush1.msra.mxu0 0.0
        %326 = vmatprep.subr.mxu0 0.0
        %327 = vmatpush1.msra.mxu0 0.0
        %328 = vmatprep.subr.mxu0 0.0
        %329 = vmatpush1.msra.mxu0 0.0
        %330 = vmatprep.subr.mxu0 0.0
        %331 = vmatpush1.msra.mxu0 0.0
        %332 = vmatprep.subr.mxu0 0.0
        %333 = vmatpush1.msra.mxu0 0.0
        %334 = vmatprep.subr.mxu0 0.0
        %335 = vmatpush1.msra.mxu0 0.0
        %336 = vmatprep.subr.mxu0 0.0
        %337 = vmatpush1.msra.mxu0 0.0
        %338 = vmatprep.subr.mxu0 0.0
        %339 = vmatpush1.msra.mxu0 0.0
        %340 = vmatprep.subr.mxu0 0.0
        %341 = vmatpush1.msra.mxu0 0.0
        %342 = vmatprep.subr.mxu0 0.0
        %343 = vmatpush1.msra.mxu0 0.0
        %344 = vmatprep.subr.mxu0 0.0
        %345 = vmatpush1.msra.mxu0 0.0
        %346 = vmatprep.subr.mxu0 0.0
        %347 = vmatpush1.msra.mxu0 0.0
        %348 = vmatprep.subr.mxu0 0.0
        %349 = vmatpush1.msra.mxu0 0.0
        %350 = vmatprep.subr.mxu0 0.0
        %351 = vmatpush1.msra.mxu0 0.0
        %352 = vmatprep.subr.mxu0 0.0
        %353 = vmatpush1.msra.mxu0 0.0
        %354 = vmatprep.subr.mxu0 0.0
        %355 = vmatpush1.msra.mxu0 0.0
        %356 = vmatprep.subr.mxu0 0.0
        %357 = vmatpush1.msra.mxu0 0.0
        %358 = vmatprep.subr.mxu0 0.0
        %359 = vmatpush1.msra.mxu0 0.0
        %360 = vmatprep.subr.mxu0 0.0
        %361 = vmatpush1.msra.mxu0 0.0
        %362 = vmatprep.subr.mxu0 0.0
        %363 = vmatpush1.msra.mxu0 0.0
        %364 = vmatprep.subr.mxu0 0.0
        %365 = vmatpush1.msra.mxu0 0.0
        %366 = vmatprep.subr.mxu0 0.0
        %367 = vmatpush1.msra.mxu0 0.0
        %368 = vmatprep.subr.mxu0 0.0
        %369 = vmatpush1.msra.mxu0 0.0
        %370 = vmatprep.subr.mxu0 0.0
        %371 = vmatpush1.msra.mxu0 0.0
        %372 = vmatprep.subr.mxu0 0.0
        %373 = vmatpush1.msra.mxu0 0.0
        %374 = vmatprep.subr.mxu0 0.0
        %375 = vmatpush1.msra.mxu0 0.0
        %376 = vmatprep.subr.mxu0 0.0
        %377 = vmatpush1.msra.mxu0 0.0
        %378 = vmatprep.subr.mxu0 0.0
        %379 = vmatpush1.msra.mxu0 0.0
        %380 = vmatprep.subr.mxu0 0.0
        %381 = vmatpush1.msra.mxu0 0.0
        %382 = vmatprep.subr.mxu0 0.0
        %383 = vmatpush1.msra.mxu0 0.0
        %384 = vmatprep.subr.mxu0 0.0
        %385 = vmatpush1.msra.mxu0 0.0
        %386 = vmatprep.mubr.f32.mxu0 0.0
        %387 = vmatmul.mubr.f32.gmra.mrb[0].mxu0 %v317
        %v388 = vpop.f32.mrb[0].mxu0
        %v389 = vadd.f32 0.0, %v388
        %v390 = vpop.f32.mrb[0].mxu0
        %391 = vmatprep.mubr.f32.mxu0 0.0
        %392 = vmatmul.mubr.f32.gmra.mrb[0].mxu0 %v320
        %v393 = vpop.f32.mrb[0].mxu0
        %v394 = vadd.f32 0.0, %v393
        %v395 = vpop.f32.mrb[0].mxu0
        %396 = vdwg.mxu0
        %398 = vrot.lane.b32.xlu0 %v310, 112
        %v399 = vpop.permute.xlu0 %398
        %v402 = vsel %vm315, %v311, 0
        %v405 = vsel %vm315, %v312, 0
        %407 = vmatprep.subr.mxu0 0.0
        %408 = vmatpush1.msra.mxu0 %v399
        %409 = vmatprep.subr.mxu0 0.0
        %410 = vmatpush1.msra.mxu0 0.0
        %411 = vmatprep.subr.mxu0 0.0
        %412 = vmatpush1.msra.mxu0 0.0
        %413 = vmatprep.subr.mxu0 0.0
        %414 = vmatpush1.msra.mxu0 0.0
        %415 = vmatprep.subr.mxu0 0.0
        %416 = vmatpush1.msra.mxu0 0.0
        %417 = vmatprep.subr.mxu0 0.0
        %418 = vmatpush1.msra.mxu0 0.0
        %419 = vmatprep.subr.mxu0 0.0
        %420 = vmatpush1.msra.mxu0 0.0
        %421 = vmatprep.subr.mxu0 0.0
        %422 = vmatpush1.msra.mxu0 0.0
        %423 = vmatprep.subr.mxu0 0.0
        %424 = vmatpush1.msra.mxu0 0.0
        %425 = vmatprep.subr.mxu0 0.0
        %426 = vmatpush1.msra.mxu0 0.0
        %427 = vmatprep.subr.mxu0 0.0
        %428 = vmatpush1.msra.mxu0 0.0
        %429 = vmatprep.subr.mxu0 0.0
        %430 = vmatpush1.msra.mxu0 0.0
        %431 = vmatprep.subr.mxu0 0.0
        %432 = vmatpush1.msra.mxu0 0.0
        %433 = vmatprep.subr.mxu0 0.0
        %434 = vmatpush1.msra.mxu0 0.0
        %435 = vmatprep.subr.mxu0 0.0
        %436 = vmatpush1.msra.mxu0 0.0
        %437 = vmatprep.subr.mxu0 0.0
        %438 = vmatpush1.msra.mxu0 0.0
        %439 = vmatprep.subr.mxu0 0.0
        %440 = vmatpush1.msra.mxu0 0.0
        %441 = vmatprep.subr.mxu0 0.0
        %442 = vmatpush1.msra.mxu0 0.0
        %443 = vmatprep.subr.mxu0 0.0
        %444 = vmatpush1.msra.mxu0 0.0
        %445 = vmatprep.subr.mxu0 0.0
        %446 = vmatpush1.msra.mxu0 0.0
        %447 = vmatprep.subr.mxu0 0.0
        %448 = vmatpush1.msra.mxu0 0.0
        %449 = vmatprep.subr.mxu0 0.0
        %450 = vmatpush1.msra.mxu0 0.0
        %451 = vmatprep.subr.mxu0 0.0
        %452 = vmatpush1.msra.mxu0 0.0
        %453 = vmatprep.subr.mxu0 0.0
        %454 = vmatpush1.msra.mxu0 0.0
        %455 = vmatprep.subr.mxu0 0.0
        %456 = vmatpush1.msra.mxu0 0.0
        %457 = vmatprep.subr.mxu0 0.0
        %458 = vmatpush1.msra.mxu0 0.0
        %459 = vmatprep.subr.mxu0 0.0
        %460 = vmatpush1.msra.mxu0 0.0
        %461 = vmatprep.subr.mxu0 0.0
        %462 = vmatpush1.msra.mxu0 0.0
        %463 = vmatprep.subr.mxu0 0.0
        %464 = vmatpush1.msra.mxu0 0.0
        %465 = vmatprep.subr.mxu0 0.0
        %466 = vmatpush1.msra.mxu0 0.0
        %467 = vmatprep.subr.mxu0 0.0
        %468 = vmatpush1.msra.mxu0 0.0
        %469 = vmatprep.subr.mxu0 0.0
        %470 = vmatpush1.msra.mxu0 0.0
        %471 = vmatprep.mubr.f32.mxu0 0.0
        %472 = vmatmul.mubr.f32.gmra.mrb[0].mxu0 %v402
        %v473 = vpop.f32.mrb[0].mxu0
        %v474 = vadd.f32 0.0, %v473
        %v475 = vpop.f32.mrb[0].mxu0
        %476 = vmatprep.mubr.f32.mxu0 0.0
        %477 = vmatmul.mubr.f32.gmra.mrb[0].mxu0 %v405
        %v478 = vpop.f32.mrb[0].mxu0
        %v479 = vadd.f32 0.0, %v478
        %v480 = vpop.f32.mrb[0].mxu0
        %481 = vdwg.mxu0
        %v482 = vld [vmem:[%s307] sm:$0x3]
        %v483 = vld [vmem:[%s307 + $0x2] sm:$0x3]
        %v484 = vunpack.c.0.s8 %v482
        %v485 = vunpack.c.0.s8 %v483
        %v486 = vcvt.s32.f32 %v484
        %v487 = vcvt.s32.f32 %v485
        %v488 = vsub.f32 %v486, 1.0
        %v489 = vsub.f32 %v487, 1.0
        %v490 = vmul.f32 %v488, 1e+30
        %v491 = vmul.f32 %v489, 1e+30
        %494 = vrot.lane.b32.xlu0 %v389, 108
        %v495 = vpop.permute.xlu0 %494
        %496 = vrot.lane.b32.xlu0 %v394, 108
        %v497 = vpop.permute.xlu0 %496
        %500 = vxpose.xlu0.b32.start [1/16] %v495, 128
        %501 = vxpose.xlu0.b32.cont [2/16] %v497, 128
        %502 = vxpose.xlu0.b32.cont [3/16] 0.0, 128
        %503 = vxpose.xlu0.b32.cont [4/16] 0.0, 128
        %504 = vxpose.xlu0.b32.cont [5/16] 0.0, 128
        %505 = vxpose.xlu0.b32.cont [6/16] 0.0, 128
        %506 = vxpose.xlu0.b32.cont [7/16] 0.0, 128
        %507 = vxpose.xlu0.b32.cont [8/16] 0.0, 128
        %508 = vxpose.xlu0.b32.cont [9/16] 0.0, 128
        %509 = vxpose.xlu0.b32.cont [10/16] 0.0, 128
        %510 = vxpose.xlu0.b32.cont [11/16] 0.0, 128
        %511 = vxpose.xlu0.b32.cont [12/16] 0.0, 128
        %512 = vxpose.xlu0.b32.cont [13/16] 0.0, 128
        %513 = vxpose.xlu0.b32.cont [14/16] 0.0, 128
        %514 = vxpose.xlu0.b32.cont [15/16] 0.0, 128
        %515 = vxpose.xlu0.b32.end [16/16] 0.0, 128
        %v516 = vpop.trf.xlu0
        %v517 = vpop.trf.xlu0
        %v518 = vpop.trf.xlu0
        %v519 = vpop.trf.xlu0
        %v520 = vpop.trf.xlu0
        %v521 = vpop.trf.xlu0
        %v522 = vpop.trf.xlu0
        %v523 = vpop.trf.xlu0
        %v524 = vpop.trf.xlu0
        %v525 = vpop.trf.xlu0
        %v526 = vpop.trf.xlu0
        %v527 = vpop.trf.xlu0
        %v528 = vpop.trf.xlu0
        %v529 = vpop.trf.xlu0
        %v530 = vpop.trf.xlu0
        %v531 = vpop.trf.xlu0
        %533 = vset.pattern.permute.xlu0 0
        %534 = vperm.xlu0 %533, %v474
        %v535 = vpop.permute.xlu0 %534
        %538 = vset.pattern.permute.xlu0 0
        %539 = vperm.xlu0 %538, %v479
        %v540 = vpop.permute.xlu0 %539
        %v542 = vlaneseq
        %v543 = vshrl.u32 %v542, 7
        %v544 = vsub.s32 0, %v543
        %v545 = vrot.slane %v516, %v544
        %v546 = vadd.f32 %v535, %v545
        %v547 = vadd.f32 %v540, %v545
        %v548 = vmul.f32 %v546, 0.2
        %v549 = vmul.f32 %v547, 0.2
        %v550 = vmax.f32 %v546, %v548
        %v551 = vmax.f32 %v547, %v549
        %v552 = vadd.f32 %v550, %v490
        %v553 = vadd.f32 %v551, %v491
        %vm554 = vcmask 130048
        %v555 = vsel %vm554, %v552, -inf
        %556 = vmax.xlane.f32.xlu0 %v555
        %v557 = vpop.xlane.xlu0 %556
        %v558 = vsel %vm554, %v553, -inf
        %559 = vmax.xlane.f32.xlu0 %v558
        %v560 = vpop.xlane.xlu0 %559
        %v561 = vsub.f32 %v552, %v557
        %v562 = vsub.f32 %v553, %v560
        %v563 = vmul.f32 %v561, 1.442695
        %v564 = vpow.pop %v563
        %v565 = vmul.f32 %v562, 1.442695
        %v566 = vpow.pop %v565
        %v567 = vsel %vm554, %v564, 0.0
        %568 = vadd.xlane.f32.xlu0 %v567
        %v569 = vpop.xlane.xlu0 %568
        %v570 = vsel %vm554, %v566, 0.0
        %571 = vadd.xlane.f32.xlu0 %v570
        %v572 = vpop.xlane.xlu0 %571
        %v574 = vsel %vm554, %v564, 0
        %v577 = vsel %vm554, %v566, 0
        %579 = vmatprep.subr.mxu0 0.0
        %580 = vmatpush1.msra.mxu0 %v389
        %581 = vmatprep.subr.mxu0 0.0
        %582 = vmatpush1.msra.mxu0 %v394
        %583 = vmatprep.subr.mxu0 0.0
        %584 = vmatpush1.msra.mxu0 0.0
        %585 = vmatprep.subr.mxu0 0.0
        %586 = vmatpush1.msra.mxu0 0.0
        %587 = vmatprep.subr.mxu0 0.0
        %588 = vmatpush1.msra.mxu0 0.0
        %589 = vmatprep.subr.mxu0 0.0
        %590 = vmatpush1.msra.mxu0 0.0
        %591 = vmatprep.subr.mxu0 0.0
        %592 = vmatpush1.msra.mxu0 0.0
        %593 = vmatprep.subr.mxu0 0.0
        %594 = vmatpush1.msra.mxu0 0.0
        %595 = vmatprep.subr.mxu0 0.0
        %596 = vmatpush1.msra.mxu0 0.0
        %597 = vmatprep.subr.mxu0 0.0
        %598 = vmatpush1.msra.mxu0 0.0
        %599 = vmatprep.subr.mxu0 0.0
        %600 = vmatpush1.msra.mxu0 0.0
        %601 = vmatprep.subr.mxu0 0.0
        %602 = vmatpush1.msra.mxu0 0.0
        %603 = vmatprep.subr.mxu0 0.0
        %604 = vmatpush1.msra.mxu0 0.0
        %605 = vmatprep.subr.mxu0 0.0
        %606 = vmatpush1.msra.mxu0 0.0
        %607 = vmatprep.subr.mxu0 0.0
        %608 = vmatpush1.msra.mxu0 0.0
        %609 = vmatprep.subr.mxu0 0.0
        %610 = vmatpush1.msra.mxu0 0.0
        %611 = vmatprep.subr.mxu0 0.0
        %612 = vmatpush1.msra.mxu0 0.0
        %613 = vmatprep.subr.mxu0 0.0
        %614 = vmatpush1.msra.mxu0 0.0
        %615 = vmatprep.subr.mxu0 0.0
        %616 = vmatpush1.msra.mxu0 0.0
        %617 = vmatprep.subr.mxu0 0.0
        %618 = vmatpush1.msra.mxu0 0.0
        %619 = vmatprep.subr.mxu0 0.0
        %620 = vmatpush1.msra.mxu0 0.0
        %621 = vmatprep.subr.mxu0 0.0
        %622 = vmatpush1.msra.mxu0 0.0
        %623 = vmatprep.subr.mxu0 0.0
        %624 = vmatpush1.msra.mxu0 0.0
        %625 = vmatprep.subr.mxu0 0.0
        %626 = vmatpush1.msra.mxu0 0.0
        %627 = vmatprep.subr.mxu0 0.0
        %628 = vmatpush1.msra.mxu0 0.0
        %629 = vmatprep.subr.mxu0 0.0
        %630 = vmatpush1.msra.mxu0 0.0
        %631 = vmatprep.subr.mxu0 0.0
        %632 = vmatpush1.msra.mxu0 0.0
        %633 = vmatprep.subr.mxu0 0.0
        %634 = vmatpush1.msra.mxu0 0.0
        %635 = vmatprep.subr.mxu0 0.0
        %636 = vmatpush1.msra.mxu0 0.0
        %637 = vmatprep.subr.mxu0 0.0
        %638 = vmatpush1.msra.mxu0 0.0
        %639 = vmatprep.subr.mxu0 0.0
        %640 = vmatpush1.msra.mxu0 0.0
        %641 = vmatprep.subr.mxu0 0.0
        %642 = vmatpush1.msra.mxu0 0.0
        %643 = vmatprep.mubr.f32.mxu0 0.0
        %644 = vmatmul.mubr.f32.gmra.mrb[0].mxu0 %v574
        %v645 = vpop.f32.mrb[0].mxu0
        %v646 = vadd.f32 0.0, %v645
        %v647 = vpop.f32.mrb[0].mxu0
        %648 = vmatprep.mubr.f32.mxu0 0.0
        %649 = vmatmul.mubr.f32.gmra.mrb[0].mxu0 %v577
        %v650 = vpop.f32.mrb[0].mxu0
        %v651 = vadd.f32 0.0, %v650
        %v652 = vpop.f32.mrb[0].mxu0
        %653 = vdwg.mxu0
        %v654 = vrcp.pop %v569
        %v655 = vmul.f32 %v646, %v654
        %v656 = vrcp.pop %v572
        %v657 = vmul.f32 %v651, %v656
        %658 = vset.pattern.permute.xlu0 1
        %659 = vperm.xlu0 %658, %v474
        %v660 = vpop.permute.xlu0 %659
        %662 = vset.pattern.permute.xlu0 1
        %663 = vperm.xlu0 %662, %v479
        %v664 = vpop.permute.xlu0 %663
        %v666 = vlaneseq
        %v667 = vshrl.u32 %v666, 7
        %v668 = vsub.s32 1, %v667
        %v669 = vrot.slane %v516, %v668
        %v670 = vadd.f32 %v660, %v669
        %v671 = vadd.f32 %v664, %v669
        %v672 = vmul.f32 %v670, 0.2
        %v673 = vmul.f32 %v671, 0.2
        %v674 = vmax.f32 %v670, %v672
        %v675 = vmax.f32 %v671, %v673
        %v676 = vadd.f32 %v674, %v490
        %v677 = vadd.f32 %v675, %v491
        %v678 = vsel %vm554, %v676, -inf
        %679 = vmax.xlane.f32.xlu0 %v678
        %v680 = vpop.xlane.xlu0 %679
        %v681 = vsel %vm554, %v677, -inf
        %682 = vmax.xlane.f32.xlu0 %v681
        %v683 = vpop.xlane.xlu0 %682
        %v684 = vsub.f32 %v676, %v680
        %v685 = vsub.f32 %v677, %v683
        %v686 = vmul.f32 %v684, 1.442695
        %v687 = vpow.pop %v686
        %v688 = vmul.f32 %v685, 1.442695
        %v689 = vpow.pop %v688
        %v690 = vsel %vm554, %v687, 0.0
        %691 = vadd.xlane.f32.xlu0 %v690
        %v692 = vpop.xlane.xlu0 %691
        %v693 = vsel %vm554, %v689, 0.0
        %694 = vadd.xlane.f32.xlu0 %v693
        %v695 = vpop.xlane.xlu0 %694
        %696 = vrot.lane.b32.xlu0 %v389, 124
        %v697 = vpop.permute.xlu0 %696
        %698 = vrot.lane.b32.xlu0 %v394, 124
        %v699 = vpop.permute.xlu0 %698
        %v703 = vsel %vm554, %v687, 0
        %v706 = vsel %vm554, %v689, 0
        %708 = vmatprep.subr.mxu0 0.0
        %709 = vmatpush1.msra.mxu0 %v697
        %710 = vmatprep.subr.mxu0 0.0
        %711 = vmatpush1.msra.mxu0 %v699
        %712 = vmatprep.subr.mxu0 0.0
        %713 = vmatpush1.msra.mxu0 0.0
        %714 = vmatprep.subr.mxu0 0.0
        %715 = vmatpush1.msra.mxu0 0.0
        %716 = vmatprep.subr.mxu0 0.0
        %717 = vmatpush1.msra.mxu0 0.0
        %718 = vmatprep.subr.mxu0 0.0
        %719 = vmatpush1.msra.mxu0 0.0
        %720 = vmatprep.subr.mxu0 0.0
        %721 = vmatpush1.msra.mxu0 0.0
        %722 = vmatprep.subr.mxu0 0.0
        %723 = vmatpush1.msra.mxu0 0.0
        %724 = vmatprep.subr.mxu0 0.0
        %725 = vmatpush1.msra.mxu0 0.0
        %726 = vmatprep.subr.mxu0 0.0
        %727 = vmatpush1.msra.mxu0 0.0
        %728 = vmatprep.subr.mxu0 0.0
        %729 = vmatpush1.msra.mxu0 0.0
        %730 = vmatprep.subr.mxu0 0.0
        %731 = vmatpush1.msra.mxu0 0.0
        %732 = vmatprep.subr.mxu0 0.0
        %733 = vmatpush1.msra.mxu0 0.0
        %734 = vmatprep.subr.mxu0 0.0
        %735 = vmatpush1.msra.mxu0 0.0
        %736 = vmatprep.subr.mxu0 0.0
        %737 = vmatpush1.msra.mxu0 0.0
        %738 = vmatprep.subr.mxu0 0.0
        %739 = vmatpush1.msra.mxu0 0.0
        %740 = vmatprep.subr.mxu0 0.0
        %741 = vmatpush1.msra.mxu0 0.0
        %742 = vmatprep.subr.mxu0 0.0
        %743 = vmatpush1.msra.mxu0 0.0
        %744 = vmatprep.subr.mxu0 0.0
        %745 = vmatpush1.msra.mxu0 0.0
        %746 = vmatprep.subr.mxu0 0.0
        %747 = vmatpush1.msra.mxu0 0.0
        %748 = vmatprep.subr.mxu0 0.0
        %749 = vmatpush1.msra.mxu0 0.0
        %750 = vmatprep.subr.mxu0 0.0
        %751 = vmatpush1.msra.mxu0 0.0
        %752 = vmatprep.subr.mxu0 0.0
        %753 = vmatpush1.msra.mxu0 0.0
        %754 = vmatprep.subr.mxu0 0.0
        %755 = vmatpush1.msra.mxu0 0.0
        %756 = vmatprep.subr.mxu0 0.0
        %757 = vmatpush1.msra.mxu0 0.0
        %758 = vmatprep.subr.mxu0 0.0
        %759 = vmatpush1.msra.mxu0 0.0
        %760 = vmatprep.subr.mxu0 0.0
        %761 = vmatpush1.msra.mxu0 0.0
        %762 = vmatprep.subr.mxu0 0.0
        %763 = vmatpush1.msra.mxu0 0.0
        %764 = vmatprep.subr.mxu0 0.0
        %765 = vmatpush1.msra.mxu0 0.0
        %766 = vmatprep.subr.mxu0 0.0
        %767 = vmatpush1.msra.mxu0 0.0
        %768 = vmatprep.subr.mxu0 0.0
        %769 = vmatpush1.msra.mxu0 0.0
        %770 = vmatprep.subr.mxu0 0.0
        %771 = vmatpush1.msra.mxu0 0.0
        %772 = vmatprep.mubr.f32.mxu0 0.0
        %773 = vmatmul.mubr.f32.gmra.mrb[0].mxu0 %v703
        %v774 = vpop.f32.mrb[0].mxu0
        %v775 = vadd.f32 0.0, %v774
        %v776 = vpop.f32.mrb[0].mxu0
        %777 = vmatprep.mubr.f32.mxu0 0.0
        %778 = vmatmul.mubr.f32.gmra.mrb[0].mxu0 %v706
        %v779 = vpop.f32.mrb[0].mxu0
        %v780 = vadd.f32 0.0, %v779
        %v781 = vpop.f32.mrb[0].mxu0
        %782 = vdwg.mxu0
        %v783 = vrcp.pop %v692
        %v784 = vmul.f32 %v775, %v783
        %v785 = vrcp.pop %v695
        %v786 = vmul.f32 %v780, %v785
        %787 = vset.pattern.permute.xlu0 2
        %788 = vperm.xlu0 %787, %v474
        %v789 = vpop.permute.xlu0 %788
        %791 = vset.pattern.permute.xlu0 2
        %792 = vperm.xlu0 %791, %v479
        %v793 = vpop.permute.xlu0 %792
        %v795 = vlaneseq
        %v796 = vshrl.u32 %v795, 7
        %v797 = vsub.s32 2, %v796
        %v798 = vrot.slane %v516, %v797
        %v799 = vadd.f32 %v789, %v798
        %v800 = vadd.f32 %v793, %v798
        %v801 = vmul.f32 %v799, 0.2
        %v802 = vmul.f32 %v800, 0.2
        %v803 = vmax.f32 %v799, %v801
        %v804 = vmax.f32 %v800, %v802
        %v805 = vadd.f32 %v803, %v490
        %v806 = vadd.f32 %v804, %v491
        %v807 = vsel %vm554, %v805, -inf
        %808 = vmax.xlane.f32.xlu0 %v807
        %v809 = vpop.xlane.xlu0 %808
        %v810 = vsel %vm554, %v806, -inf
        %811 = vmax.xlane.f32.xlu0 %v810
        %v812 = vpop.xlane.xlu0 %811
        %v813 = vsub.f32 %v805, %v809
        %v814 = vsub.f32 %v806, %v812
        %v815 = vmul.f32 %v813, 1.442695
        %v816 = vpow.pop %v815
        %v817 = vmul.f32 %v814, 1.442695
        %v818 = vpow.pop %v817
        %v819 = vsel %vm554, %v816, 0.0
        %820 = vadd.xlane.f32.xlu0 %v819
        %v821 = vpop.xlane.xlu0 %820
        %v822 = vsel %vm554, %v818, 0.0
        %823 = vadd.xlane.f32.xlu0 %v822
        %v824 = vpop.xlane.xlu0 %823
        %825 = vrot.lane.b32.xlu0 %v389, 120
        %v826 = vpop.permute.xlu0 %825
        %827 = vrot.lane.b32.xlu0 %v394, 120
        %v828 = vpop.permute.xlu0 %827
        %v832 = vsel %vm554, %v816, 0
        %v835 = vsel %vm554, %v818, 0
        %837 = vmatprep.subr.mxu0 0.0
        %838 = vmatpush1.msra.mxu0 %v826
        %839 = vmatprep.subr.mxu0 0.0
        %840 = vmatpush1.msra.mxu0 %v828
        %841 = vmatprep.subr.mxu0 0.0
        %842 = vmatpush1.msra.mxu0 0.0
        %843 = vmatprep.subr.mxu0 0.0
        %844 = vmatpush1.msra.mxu0 0.0
        %845 = vmatprep.subr.mxu0 0.0
        %846 = vmatpush1.msra.mxu0 0.0
        %847 = vmatprep.subr.mxu0 0.0
        %848 = vmatpush1.msra.mxu0 0.0
        %849 = vmatprep.subr.mxu0 0.0
        %850 = vmatpush1.msra.mxu0 0.0
        %851 = vmatprep.subr.mxu0 0.0
        %852 = vmatpush1.msra.mxu0 0.0
        %853 = vmatprep.subr.mxu0 0.0
        %854 = vmatpush1.msra.mxu0 0.0
        %855 = vmatprep.subr.mxu0 0.0
        %856 = vmatpush1.msra.mxu0 0.0
        %857 = vmatprep.subr.mxu0 0.0
        %858 = vmatpush1.msra.mxu0 0.0
        %859 = vmatprep.subr.mxu0 0.0
        %860 = vmatpush1.msra.mxu0 0.0
        %861 = vmatprep.subr.mxu0 0.0
        %862 = vmatpush1.msra.mxu0 0.0
        %863 = vmatprep.subr.mxu0 0.0
        %864 = vmatpush1.msra.mxu0 0.0
        %865 = vmatprep.subr.mxu0 0.0
        %866 = vmatpush1.msra.mxu0 0.0
        %867 = vmatprep.subr.mxu0 0.0
        %868 = vmatpush1.msra.mxu0 0.0
        %869 = vmatprep.subr.mxu0 0.0
        %870 = vmatpush1.msra.mxu0 0.0
        %871 = vmatprep.subr.mxu0 0.0
        %872 = vmatpush1.msra.mxu0 0.0
        %873 = vmatprep.subr.mxu0 0.0
        %874 = vmatpush1.msra.mxu0 0.0
        %875 = vmatprep.subr.mxu0 0.0
        %876 = vmatpush1.msra.mxu0 0.0
        %877 = vmatprep.subr.mxu0 0.0
        %878 = vmatpush1.msra.mxu0 0.0
        %879 = vmatprep.subr.mxu0 0.0
        %880 = vmatpush1.msra.mxu0 0.0
        %881 = vmatprep.subr.mxu0 0.0
        %882 = vmatpush1.msra.mxu0 0.0
        %883 = vmatprep.subr.mxu0 0.0
        %884 = vmatpush1.msra.mxu0 0.0
        %885 = vmatprep.subr.mxu0 0.0
        %886 = vmatpush1.msra.mxu0 0.0
        %887 = vmatprep.subr.mxu0 0.0
        %888 = vmatpush1.msra.mxu0 0.0
        %889 = vmatprep.subr.mxu0 0.0
        %890 = vmatpush1.msra.mxu0 0.0
        %891 = vmatprep.subr.mxu0 0.0
        %892 = vmatpush1.msra.mxu0 0.0
        %893 = vmatprep.subr.mxu0 0.0
        %894 = vmatpush1.msra.mxu0 0.0
        %895 = vmatprep.subr.mxu0 0.0
        %896 = vmatpush1.msra.mxu0 0.0
        %897 = vmatprep.subr.mxu0 0.0
        %898 = vmatpush1.msra.mxu0 0.0
        %899 = vmatprep.subr.mxu0 0.0
        %900 = vmatpush1.msra.mxu0 0.0
        %901 = vmatprep.mubr.f32.mxu0 0.0
        %902 = vmatmul.mubr.f32.gmra.mrb[0].mxu0 %v832
        %v903 = vpop.f32.mrb[0].mxu0
        %v904 = vadd.f32 0.0, %v903
        %v905 = vpop.f32.mrb[0].mxu0
        %906 = vmatprep.mubr.f32.mxu0 0.0
        %907 = vmatmul.mubr.f32.gmra.mrb[0].mxu0 %v835
        %v908 = vpop.f32.mrb[0].mxu0
        %v909 = vadd.f32 0.0, %v908
        %v910 = vpop.f32.mrb[0].mxu0
        %911 = vdwg.mxu0
        %v912 = vrcp.pop %v821
        %v913 = vmul.f32 %v904, %v912
        %v914 = vrcp.pop %v824
        %v915 = vmul.f32 %v909, %v914
        %916 = vset.pattern.permute.xlu0 3
        %917 = vperm.xlu0 %916, %v474
        %v918 = vpop.permute.xlu0 %917
        %920 = vset.pattern.permute.xlu0 3
        %921 = vperm.xlu0 %920, %v479
        %v922 = vpop.permute.xlu0 %921
        %v924 = vlaneseq
        %v925 = vshrl.u32 %v924, 7
        %v926 = vsub.s32 3, %v925
        %v927 = vrot.slane %v516, %v926
        %v928 = vadd.f32 %v918, %v927
        %v929 = vadd.f32 %v922, %v927
        %v930 = vmul.f32 %v928, 0.2
        %v931 = vmul.f32 %v929, 0.2
        %v932 = vmax.f32 %v928, %v930
        %v933 = vmax.f32 %v929, %v931
        %v934 = vadd.f32 %v932, %v490
        %v935 = vadd.f32 %v933, %v491
        %v936 = vsel %vm554, %v934, -inf
        %937 = vmax.xlane.f32.xlu0 %v936
        %v938 = vpop.xlane.xlu0 %937
        %v939 = vsel %vm554, %v935, -inf
        %940 = vmax.xlane.f32.xlu0 %v939
        %v941 = vpop.xlane.xlu0 %940
        %v942 = vsub.f32 %v934, %v938
        %v943 = vsub.f32 %v935, %v941
        %v944 = vmul.f32 %v942, 1.442695
        %v945 = vpow.pop %v944
        %v946 = vmul.f32 %v943, 1.442695
        %v947 = vpow.pop %v946
        %v948 = vsel %vm554, %v945, 0.0
        %949 = vadd.xlane.f32.xlu0 %v948
        %v950 = vpop.xlane.xlu0 %949
        %v951 = vsel %vm554, %v947, 0.0
        %952 = vadd.xlane.f32.xlu0 %v951
        %v953 = vpop.xlane.xlu0 %952
        %954 = vrot.lane.b32.xlu0 %v389, 116
        %v955 = vpop.permute.xlu0 %954
        %956 = vrot.lane.b32.xlu0 %v394, 116
        %v957 = vpop.permute.xlu0 %956
        %v961 = vsel %vm554, %v945, 0
        %v964 = vsel %vm554, %v947, 0
        %966 = vmatprep.subr.mxu0 0.0
        %967 = vmatpush1.msra.mxu0 %v955
        %968 = vmatprep.subr.mxu0 0.0
        %969 = vmatpush1.msra.mxu0 %v957
        %970 = vmatprep.subr.mxu0 0.0
        %971 = vmatpush1.msra.mxu0 0.0
        %972 = vmatprep.subr.mxu0 0.0
        %973 = vmatpush1.msra.mxu0 0.0
        %974 = vmatprep.subr.mxu0 0.0
        %975 = vmatpush1.msra.mxu0 0.0
        %976 = vmatprep.subr.mxu0 0.0
        %977 = vmatpush1.msra.mxu0 0.0
        %978 = vmatprep.subr.mxu0 0.0
        %979 = vmatpush1.msra.mxu0 0.0
        %980 = vmatprep.subr.mxu0 0.0
        %981 = vmatpush1.msra.mxu0 0.0
        %982 = vmatprep.subr.mxu0 0.0
        %983 = vmatpush1.msra.mxu0 0.0
        %984 = vmatprep.subr.mxu0 0.0
        %985 = vmatpush1.msra.mxu0 0.0
        %986 = vmatprep.subr.mxu0 0.0
        %987 = vmatpush1.msra.mxu0 0.0
        %988 = vmatprep.subr.mxu0 0.0
        %989 = vmatpush1.msra.mxu0 0.0
        %990 = vmatprep.subr.mxu0 0.0
        %991 = vmatpush1.msra.mxu0 0.0
        %992 = vmatprep.subr.mxu0 0.0
        %993 = vmatpush1.msra.mxu0 0.0
        %994 = vmatprep.subr.mxu0 0.0
        %995 = vmatpush1.msra.mxu0 0.0
        %996 = vmatprep.subr.mxu0 0.0
        %997 = vmatpush1.msra.mxu0 0.0
        %998 = vmatprep.subr.mxu0 0.0
        %999 = vmatpush1.msra.mxu0 0.0
        %1000 = vmatprep.subr.mxu0 0.0
        %1001 = vmatpush1.msra.mxu0 0.0
        %1002 = vmatprep.subr.mxu0 0.0
        %1003 = vmatpush1.msra.mxu0 0.0
        %1004 = vmatprep.subr.mxu0 0.0
        %1005 = vmatpush1.msra.mxu0 0.0
        %1006 = vmatprep.subr.mxu0 0.0
        %1007 = vmatpush1.msra.mxu0 0.0
        %1008 = vmatprep.subr.mxu0 0.0
        %1009 = vmatpush1.msra.mxu0 0.0
        %1010 = vmatprep.subr.mxu0 0.0
        %1011 = vmatpush1.msra.mxu0 0.0
        %1012 = vmatprep.subr.mxu0 0.0
        %1013 = vmatpush1.msra.mxu0 0.0
        %1014 = vmatprep.subr.mxu0 0.0
        %1015 = vmatpush1.msra.mxu0 0.0
        %1016 = vmatprep.subr.mxu0 0.0
        %1017 = vmatpush1.msra.mxu0 0.0
        %1018 = vmatprep.subr.mxu0 0.0
        %1019 = vmatpush1.msra.mxu0 0.0
        %1020 = vmatprep.subr.mxu0 0.0
        %1021 = vmatpush1.msra.mxu0 0.0
        %1022 = vmatprep.subr.mxu0 0.0
        %1023 = vmatpush1.msra.mxu0 0.0
        %1024 = vmatprep.subr.mxu0 0.0
        %1025 = vmatpush1.msra.mxu0 0.0
        %1026 = vmatprep.subr.mxu0 0.0
        %1027 = vmatpush1.msra.mxu0 0.0
        %1028 = vmatprep.subr.mxu0 0.0
        %1029 = vmatpush1.msra.mxu0 0.0
        %1030 = vmatprep.mubr.f32.mxu0 0.0
        %1031 = vmatmul.mubr.f32.gmra.mrb[0].mxu0 %v961
        %v1032 = vpop.f32.mrb[0].mxu0
        %v1033 = vadd.f32 0.0, %v1032
        %v1034 = vpop.f32.mrb[0].mxu0
        %1035 = vmatprep.mubr.f32.mxu0 0.0
        %1036 = vmatmul.mubr.f32.gmra.mrb[0].mxu0 %v964
        %v1037 = vpop.f32.mrb[0].mxu0
        %v1038 = vadd.f32 0.0, %v1037
        %v1039 = vpop.f32.mrb[0].mxu0
        %1040 = vdwg.mxu0
        %v1041 = vrcp.pop %v950
        %v1042 = vmul.f32 %v1033, %v1041
        %v1043 = vrcp.pop %v953
        %v1044 = vmul.f32 %v1038, %v1043
        %1047 = vrot.lane.b32.xlu0 %v784, 4
        %v1048 = vpop.permute.xlu0 %1047
        %1049 = vrot.lane.b32.xlu0 %v786, 4
        %v1050 = vpop.permute.xlu0 %1049
        %1055 = vrot.lane.b32.xlu0 %v913, 8
        %v1056 = vpop.permute.xlu0 %1055
        %1057 = vrot.lane.b32.xlu0 %v915, 8
        %v1058 = vpop.permute.xlu0 %1057
        %1063 = vrot.lane.b32.xlu0 %v1042, 12
        %v1064 = vpop.permute.xlu0 %1063
        %1065 = vrot.lane.b32.xlu0 %v1044, 12
        %v1066 = vpop.permute.xlu0 %1065
        %vm1069 = vcmask 31744
        %v1070 = vsel %vm1069, %v655, %v1048
        %v1071 = vsel %vm1069, %v657, %v1050
        %v1072 = vsel %vm315, %v1070, %v1056
        %v1073 = vsel %vm315, %v1071, %v1058
        %vm1074 = vcmask 97280
        %v1075 = vsel %vm1074, %v1072, %v1064
        %v1076 = vsel %vm1074, %v1073, %v1066
        %1077 = vrot.lane.b32.xlu0 %v474, 120
        %v1078 = vpop.permute.xlu0 %1077
        %1079 = vrot.lane.b32.xlu0 %v479, 120
        %v1080 = vpop.permute.xlu0 %1079
        %v1083 = vadd.f32 %v1075, %v1078
        %v1084 = vadd.f32 %v1076, %v1080
        %v1085 = vld [vmem:[%s4] sm:$0x1]
        %v1087 = vlaneseq
        %v1088 = vshrl.u32 %v1087, 7
        %v1089 = vsub.s32 0, %v1088
        %v1090 = vrot.slane %v1085, %v1089
        %v1092 = vadd.f32 %v1083, %v1090
        %v1093 = vadd.f32 %v1084, %v1090
        %1094 = vst.msk [vmem:[%s283] sm:$0xff] %vm554, %v1092
        %1095 = vst.msk [vmem:[%s283 + $0x8] sm:$0xff] %vm554, %v1093
        %s1096 = sand.u32 %s165, 1
        %s1097 = scalar_lea.sflag [#allocation3], %s1096
        %s1098 = sand.u32 %s165, 1
        %s1099 = smul.addr %s1098, 16
        %s1100 = scalar_lea.vmem [#allocation2], %s1099
        // Predicated region
        $region41: #{tpu_custom_call.1} parent=39 // pred_check
          %p1101 = pneg %p175
        $region42: #{tpu_custom_call.1} parent=39 // pred_check_branch
          %1103 = sbr.rel (%p1101) target = $region44
        $region43: #{tpu_custom_call.1} parent=39 // pred_region
          %s1104 = smul.u32 2, %s24
          %s1106 = ssub.s32 256, 256
          %1107 = vsyncadd %s1097, %s1106
          %s1108 = smul.addr %s23, 2
          %s1109 = sadd.s32 %s1104, %s1108
          %s1110 = smul.addr %s1109, 128
          %s1111 = scalar_lea.hbm %s5, %s1110
          %s1112 = sshll.u32 %s1100, 4
          %s1113 = int_to_ptr.vmem [resolvable:$true] %s1112
          %1118 = dma.vmem_to_hbm [thread:$0]  %s1113, 256, %s1111, %s1097, 128, 128, 8
        $region44: #{tpu_custom_call.1} parent=39 // pred_fallthru
          _
      $region40: #{tpu_custom_call.1} parent=5 // pred_fallthru
        _
      %p1119 = scmp.le.s32.totalorder 2, %s14
      // Predicated region
      $region45: #{tpu_custom_call.1} parent=5 // pred_check
        %p1120 = pneg %p1119
      $region46: #{tpu_custom_call.1} parent=5 // pred_check_branch
        %1122 = sbr.rel (%p1120) target = $region48
      $region47: #{tpu_custom_call.1} parent=5 // pred_region
        %s1123 = ssub.s32 %s14, 2
        // Predicated region
        $region49: #{tpu_custom_call.1} parent=47 // pred_check
          %p1124 = pneg %p181
        $region50: #{tpu_custom_call.1} parent=47 // pred_check_branch
          %1126 = sbr.rel (%p1124) target = $region52
        $region51: #{tpu_custom_call.1} parent=47 // pred_region
          %s1127 = sand.u32 %s166, 1
          %s1128 = scalar_lea.sflag [#allocation3], %s1127
          %s1129 = sand.u32 %s166, 1
          %s1130 = smul.addr %s1129, 16
          %s1131 = scalar_lea.vmem [#allocation2], %s1130
          %1132 = dma.done %s1128, 256
        $region52: #{tpu_custom_call.1} parent=47 // pred_fallthru
          _
      $region48: #{tpu_custom_call.1} parent=5 // pred_fallthru
        _
    $region6: #{tpu_custom_call.1} parent=1 // loop_footer
      %s18 = sadd.s32 1, %s14
    $region7: #{tpu_custom_call.1} parent=1 // loop_footer_branch
      %13 = sbr.rel target = $region3
    $region8: #{tpu_custom_call.1} parent=1 // loop_exit
      _
    %1133 = vsyncpa [#allocation3], 1
    %s1134 = scalar_lea.sflag [#allocation3], 1
    %1135 = vsyncpa %s1134, 1

</llo_original>
